<compile_context>
chip_gen: v6e
topology: v6e:2x2x1
jax: 0.10.0
libtpu: 0.0.40
codegen_flags: <defaults>
</compile_context>

<pallas_src>
import jax
import jax.numpy as jnp
from jax.experimental import pallas as pl
from jax.experimental.pallas import tpu as pltpu


def _concat_kernel(xr_ref, xc_ref, o_ref):
    # xr_ref: (1, C, TI)  -- x[b, :, i*TI : (i+1)*TI]   (for the "rows" part)
    # xc_ref: (1, C, TJ)  -- x[b, :, j*TJ : (j+1)*TJ]   (for the "cols" part)
    # o_ref : (1, C, TI, TJ) output tile (channels fused into the block)
    p = pl.program_id(1)  # 0 -> rows half (channels [0,C)), 1 -> cols half ([C,2C))
    C = o_ref.shape[1]
    TI = o_ref.shape[2]
    TJ = o_ref.shape[3]

    @pl.when(p == 0)
    def _rows():
        for c in range(C):                       # static, C is small (4)
            xi = xr_ref[0, c, :]                 # (TI,)
            o_ref[0, c] = jnp.broadcast_to(xi[:, None], (TI, TJ))

    @pl.when(p == 1)
    def _cols():
        for c in range(C):
            xj = xc_ref[0, c, :]                 # (TJ,)
            o_ref[0, c] = jnp.broadcast_to(xj[None, :], (TI, TJ))


def _pick_tile(L: int, target: int, quantum: int = 128) -> int:
    """Largest multiple of `quantum` that divides L and is <= target; else full L."""
    if L % quantum != 0:
        return L
    for k in range(min(target, L) // quantum, 0, -1):
        cand = k * quantum
        if L % cand == 0:
            return cand
    return L


def _reference(x: jax.Array) -> jax.Array:
    # Pure-JAX mirror of the PyTorch forward (also the small-problem fallback).
    B, C, L = x.shape
    rows = jnp.broadcast_to(x[:, :, :, None], (B, C, L, L))
    cols = jnp.transpose(rows, (0, 1, 3, 2))
    return jnp.concatenate((rows, cols), axis=1)


def concatenate(x: jax.Array, *, min_pallas_bytes: int = 1 << 20) -> jax.Array:
    """x: (B, C, L) -> (B, 2C, L, L), matching the PyTorch Concatenate module.

    For tiny outputs (< min_pallas_bytes) the fused XLA broadcast is faster than
    any kernel launch, so we fall back to it; pass min_pallas_bytes=0 to force
    the Pallas path.
    """
    B, C, L = x.shape
    out_bytes = B * 2 * C * L * L * x.dtype.itemsize
    if out_bytes < min_pallas_bytes:
        return _reference(x)

    # Lane-dense tiles: multiples of 128 (satisfies sublane minimums for
    # f32/bf16/int8 too), TJ >= 512 preferred; fall back to the full dim when L
    # is not a multiple of 128 (full-extent blocks are always legal).
    TI = _pick_tile(L, target=256)
    TJ = _pick_tile(L, target=512)
    n_i = L // TI
    n_j = L // TJ

    grid = (B, 2, n_i, n_j)

    return pl.pallas_call(
        _concat_kernel,
        out_shape=jax.ShapeDtypeStruct((B, 2 * C, L, L), x.dtype),
        grid=grid,
        in_specs=[
            # "rows" source: x[b, :, i*TI:(i+1)*TI] -- constant across p and j,
            # so Pallas skips re-fetching it on the fast (j) axis.
            pl.BlockSpec((1, C, TI), lambda b, p, i, j: (b, 0, i)),
            # "cols" source: x[b, :, j*TJ:(j+1)*TJ]
            pl.BlockSpec((1, C, TJ), lambda b, p, i, j: (b, 0, j)),
        ],
        # Channel-fused output block: p selects rows half (p=0) vs cols half (p=1).
        out_specs=pl.BlockSpec((1, C, TI, TJ), lambda b, p, i, j: (b, p, i, j)),
        compiler_params=pltpu.CompilerParams(
            dimension_semantics=("parallel", "parallel", "parallel", "parallel")
        ),
    )(x, x)


if __name__ == "__main__":
    key = jax.random.PRNGKey(0)

    # Small test shape from the module spec (B x 4 x L). Force the Pallas path.
    B, C, L = 2, 4, 16
    x = jax.random.normal(key, (B, C, L), dtype=jnp.float32)
    out = concatenate(x, min_pallas_bytes=0)
    out = jax.block_until_ready(out)
    ref = _reference(x)
    assert out.shape == (B, 2 * C, L, L), out.shape
    assert out.dtype == x.dtype
    assert jnp.allclose(out, ref), "Pallas output mismatch vs reference (small L)"

    # Larger L to exercise the multi-tile (lane-dense) path: TI=128, TJ=384.
    B2, L2 = 1, 384
    x2 = jax.random.normal(jax.random.PRNGKey(1), (B2, C, L2), dtype=jnp.float32)
    out2 = jax.block_until_ready(concatenate(x2, min_pallas_bytes=0))
    assert jnp.allclose(out2, _reference(x2)), "Pallas output mismatch (tiled path)"

    print("KERNEL_OK")
</pallas_src>

<mosaic_0001>
module attributes {stable_mosaic.version = 11 : i64} {
  func.func @_concat_kernel(%arg0: i32, %arg1: i32, %arg2: i32, %arg3: i32, %arg4: memref<1x4x16xf32, #tpu.memory_space<vmem>>, %arg5: memref<1x4x16xf32, #tpu.memory_space<vmem>>, %arg6: memref<1x4x16x16xf32, #tpu.memory_space<vmem>>) attributes {dimension_semantics = [#tpu.dimension_semantics<parallel>, #tpu.dimension_semantics<parallel>, #tpu.dimension_semantics<parallel>, #tpu.dimension_semantics<parallel>], iteration_bounds = array<i64: 2, 2, 1, 1>, scalar_prefetch = 0 : i64, scratch_operands = 0 : i64, tpu.core_type = #tpu.core_type<tc>, window_params = [{transform_indices = @transform_0, window_bounds = array<i64: 1, 4, 16>}, {transform_indices = @transform_1, window_bounds = array<i64: 1, 4, 16>}, {transform_indices = @transform_2, window_bounds = array<i64: 1, 4, 16, 16>}]} {
    %c0_i32 = arith.constant 0 : i32
    %0 = arith.cmpi eq, %arg1, %c0_i32 : i32
    %1 = arith.extui %0 : i1 to i32
    %c0_i32_0 = arith.constant 0 : i32
    %2 = arith.cmpi ne, %1, %c0_i32_0 : i32
    scf.if %2 {
      %c0 = arith.constant 0 : index
      %c0_2 = arith.constant 0 : index
      %c0_3 = arith.constant 0 : index
      %6 = vector.load %arg4[%c0, %c0_2, %c0_3] : memref<1x4x16xf32, #tpu.memory_space<vmem>>, vector<1x1x16xf32>
      %7 = vector.shape_cast %6 : vector<1x1x16xf32> to vector<16xf32>
      %8 = vector.shape_cast %7 : vector<16xf32> to vector<16x1xf32>
      %9 = vector.shape_cast %8 : vector<16x1xf32> to vector<16x1xf32>
      %10 = vector.broadcast %9 : vector<16x1xf32> to vector<16x16xf32>
      %c0_4 = arith.constant 0 : index
      %c0_5 = arith.constant 0 : index
      %c0_6 = arith.constant 0 : index
      %c0_7 = arith.constant 0 : index
      %11 = vector.load %arg6[%c0_4, %c0_5, %c0_6, %c0_7] : memref<1x4x16x16xf32, #tpu.memory_space<vmem>>, vector<1x1x16x16xf32>
      %12 = vector.shape_cast %11 : vector<1x1x16x16xf32> to vector<16x16xf32>
      %13 = vector.shape_cast %10 : vector<16x16xf32> to vector<1x1x16x16xf32>
      tpu.vector_store %arg6[%c0_4, %c0_5, %c0_6, %c0_7], %13 {strides = array<i32>} : memref<1x4x16x16xf32, #tpu.memory_space<vmem>>, vector<1x1x16x16xf32>,
      %c0_8 = arith.constant 0 : index
      %c1 = arith.constant 1 : index
      %c0_9 = arith.constant 0 : index
      %14 = vector.load %arg4[%c0_8, %c1, %c0_9] : memref<1x4x16xf32, #tpu.memory_space<vmem>>, vector<1x1x16xf32>
      %15 = vector.shape_cast %14 : vector<1x1x16xf32> to vector<16xf32>
      %16 = vector.shape_cast %15 : vector<16xf32> to vector<16x1xf32>
      %17 = vector.shape_cast %16 : vector<16x1xf32> to vector<16x1xf32>
      %18 = vector.broadcast %17 : vector<16x1xf32> to vector<16x16xf32>
      %c0_10 = arith.constant 0 : index
      %c1_11 = arith.constant 1 : index
      %c0_12 = arith.constant 0 : index
      %c0_13 = arith.constant 0 : index
      %19 = vector.load %arg6[%c0_10, %c1_11, %c0_12, %c0_13] : memref<1x4x16x16xf32, #tpu.memory_space<vmem>>, vector<1x1x16x16xf32>
      %20 = vector.shape_cast %19 : vector<1x1x16x16xf32> to vector<16x16xf32>
      %21 = vector.shape_cast %18 : vector<16x16xf32> to vector<1x1x16x16xf32>
      tpu.vector_store %arg6[%c0_10, %c1_11, %c0_12, %c0_13], %21 {strides = array<i32>} : memref<1x4x16x16xf32, #tpu.memory_space<vmem>>, vector<1x1x16x16xf32>,
      %c0_14 = arith.constant 0 : index
      %c2 = arith.constant 2 : index
      %c0_15 = arith.constant 0 : index
      %22 = vector.load %arg4[%c0_14, %c2, %c0_15] : memref<1x4x16xf32, #tpu.memory_space<vmem>>, vector<1x1x16xf32>
      %23 = vector.shape_cast %22 : vector<1x1x16xf32> to vector<16xf32>
      %24 = vector.shape_cast %23 : vector<16xf32> to vector<16x1xf32>
      %25 = vector.shape_cast %24 : vector<16x1xf32> to vector<16x1xf32>
      %26 = vector.broadcast %25 : vector<16x1xf32> to vector<16x16xf32>
      %c0_16 = arith.constant 0 : index
      %c2_17 = arith.constant 2 : index
      %c0_18 = arith.constant 0 : index
      %c0_19 = arith.constant 0 : index
      %27 = vector.load %arg6[%c0_16, %c2_17, %c0_18, %c0_19] : memref<1x4x16x16xf32, #tpu.memory_space<vmem>>, vector<1x1x16x16xf32>
      %28 = vector.shape_cast %27 : vector<1x1x16x16xf32> to vector<16x16xf32>
      %29 = vector.shape_cast %26 : vector<16x16xf32> to vector<1x1x16x16xf32>
      tpu.vector_store %arg6[%c0_16, %c2_17, %c0_18, %c0_19], %29 {strides = array<i32>} : memref<1x4x16x16xf32, #tpu.memory_space<vmem>>, vector<1x1x16x16xf32>,
      %c0_20 = arith.constant 0 : index
      %c3 = arith.constant 3 : index
      %c0_21 = arith.constant 0 : index
      %30 = vector.load %arg4[%c0_20, %c3, %c0_21] : memref<1x4x16xf32, #tpu.memory_space<vmem>>, vector<1x1x16xf32>
      %31 = vector.shape_cast %30 : vector<1x1x16xf32> to vector<16xf32>
      %32 = vector.shape_cast %31 : vector<16xf32> to vector<16x1xf32>
      %33 = vector.shape_cast %32 : vector<16x1xf32> to vector<16x1xf32>
      %34 = vector.broadcast %33 : vector<16x1xf32> to vector<16x16xf32>
      %c0_22 = arith.constant 0 : index
      %c3_23 = arith.constant 3 : index
      %c0_24 = arith.constant 0 : index
      %c0_25 = arith.constant 0 : index
      %35 = vector.load %arg6[%c0_22, %c3_23, %c0_24, %c0_25] : memref<1x4x16x16xf32, #tpu.memory_space<vmem>>, vector<1x1x16x16xf32>
      %36 = vector.shape_cast %35 : vector<1x1x16x16xf32> to vector<16x16xf32>
      %37 = vector.shape_cast %34 : vector<16x16xf32> to vector<1x1x16x16xf32>
      tpu.vector_store %arg6[%c0_22, %c3_23, %c0_24, %c0_25], %37 {strides = array<i32>} : memref<1x4x16x16xf32, #tpu.memory_space<vmem>>, vector<1x1x16x16xf32>,
    } else {
    }
    %c1_i32 = arith.constant 1 : i32
    %3 = arith.cmpi eq, %arg1, %c1_i32 : i32
    %4 = arith.extui %3 : i1 to i32
    %c0_i32_1 = arith.constant 0 : i32
    %5 = arith.cmpi ne, %4, %c0_i32_1 : i32
    scf.if %5 {
      %c0 = arith.constant 0 : index
      %c0_2 = arith.constant 0 : index
      %c0_3 = arith.constant 0 : index
      %6 = vector.load %arg5[%c0, %c0_2, %c0_3] : memref<1x4x16xf32, #tpu.memory_space<vmem>>, vector<1x1x16xf32>
      %7 = vector.shape_cast %6 : vector<1x1x16xf32> to vector<16xf32>
      %8 = vector.shape_cast %7 : vector<16xf32> to vector<1x16xf32>
      %9 = vector.shape_cast %8 : vector<1x16xf32> to vector<1x16xf32>
      %10 = vector.broadcast %9 : vector<1x16xf32> to vector<16x16xf32>
      %c0_4 = arith.constant 0 : index
      %c0_5 = arith.constant 0 : index
      %c0_6 = arith.constant 0 : index
      %c0_7 = arith.constant 0 : index
      %11 = vector.load %arg6[%c0_4, %c0_5, %c0_6, %c0_7] : memref<1x4x16x16xf32, #tpu.memory_space<vmem>>, vector<1x1x16x16xf32>
      %12 = vector.shape_cast %11 : vector<1x1x16x16xf32> to vector<16x16xf32>
      %13 = vector.shape_cast %10 : vector<16x16xf32> to vector<1x1x16x16xf32>
      tpu.vector_store %arg6[%c0_4, %c0_5, %c0_6, %c0_7], %13 {strides = array<i32>} : memref<1x4x16x16xf32, #tpu.memory_space<vmem>>, vector<1x1x16x16xf32>,
      %c0_8 = arith.constant 0 : index
      %c1 = arith.constant 1 : index
      %c0_9 = arith.constant 0 : index
      %14 = vector.load %arg5[%c0_8, %c1, %c0_9] : memref<1x4x16xf32, #tpu.memory_space<vmem>>, vector<1x1x16xf32>
      %15 = vector.shape_cast %14 : vector<1x1x16xf32> to vector<16xf32>
      %16 = vector.shape_cast %15 : vector<16xf32> to vector<1x16xf32>
      %17 = vector.shape_cast %16 : vector<1x16xf32> to vector<1x16xf32>
      %18 = vector.broadcast %17 : vector<1x16xf32> to vector<16x16xf32>
      %c0_10 = arith.constant 0 : index
      %c1_11 = arith.constant 1 : index
      %c0_12 = arith.constant 0 : index
      %c0_13 = arith.constant 0 : index
      %19 = vector.load %arg6[%c0_10, %c1_11, %c0_12, %c0_13] : memref<1x4x16x16xf32, #tpu.memory_space<vmem>>, vector<1x1x16x16xf32>
      %20 = vector.shape_cast %19 : vector<1x1x16x16xf32> to vector<16x16xf32>
      %21 = vector.shape_cast %18 : vector<16x16xf32> to vector<1x1x16x16xf32>
      tpu.vector_store %arg6[%c0_10, %c1_11, %c0_12, %c0_13], %21 {strides = array<i32>} : memref<1x4x16x16xf32, #tpu.memory_space<vmem>>, vector<1x1x16x16xf32>,
      %c0_14 = arith.constant 0 : index
      %c2 = arith.constant 2 : index
      %c0_15 = arith.constant 0 : index
      %22 = vector.load %arg5[%c0_14, %c2, %c0_15] : memref<1x4x16xf32, #tpu.memory_space<vmem>>, vector<1x1x16xf32>
      %23 = vector.shape_cast %22 : vector<1x1x16xf32> to vector<16xf32>
      %24 = vector.shape_cast %23 : vector<16xf32> to vector<1x16xf32>
      %25 = vector.shape_cast %24 : vector<1x16xf32> to vector<1x16xf32>
      %26 = vector.broadcast %25 : vector<1x16xf32> to vector<16x16xf32>
      %c0_16 = arith.constant 0 : index
      %c2_17 = arith.constant 2 : index
      %c0_18 = arith.constant 0 : index
      %c0_19 = arith.constant 0 : index
      %27 = vector.load %arg6[%c0_16, %c2_17, %c0_18, %c0_19] : memref<1x4x16x16xf32, #tpu.memory_space<vmem>>, vector<1x1x16x16xf32>
      %28 = vector.shape_cast %27 : vector<1x1x16x16xf32> to vector<16x16xf32>
      %29 = vector.shape_cast %26 : vector<16x16xf32> to vector<1x1x16x16xf32>
      tpu.vector_store %arg6[%c0_16, %c2_17, %c0_18, %c0_19], %29 {strides = array<i32>} : memref<1x4x16x16xf32, #tpu.memory_space<vmem>>, vector<1x1x16x16xf32>,
      %c0_20 = arith.constant 0 : index
      %c3 = arith.constant 3 : index
      %c0_21 = arith.constant 0 : index
      %30 = vector.load %arg5[%c0_20, %c3, %c0_21] : memref<1x4x16xf32, #tpu.memory_space<vmem>>, vector<1x1x16xf32>
      %31 = vector.shape_cast %30 : vector<1x1x16xf32> to vector<16xf32>
      %32 = vector.shape_cast %31 : vector<16xf32> to vector<1x16xf32>
      %33 = vector.shape_cast %32 : vector<1x16xf32> to vector<1x16xf32>
      %34 = vector.broadcast %33 : vector<1x16xf32> to vector<16x16xf32>
      %c0_22 = arith.constant 0 : index
      %c3_23 = arith.constant 3 : index
      %c0_24 = arith.constant 0 : index
      %c0_25 = arith.constant 0 : index
      %35 = vector.load %arg6[%c0_22, %c3_23, %c0_24, %c0_25] : memref<1x4x16x16xf32, #tpu.memory_space<vmem>>, vector<1x1x16x16xf32>
      %36 = vector.shape_cast %35 : vector<1x1x16x16xf32> to vector<16x16xf32>
      %37 = vector.shape_cast %34 : vector<16x16xf32> to vector<1x1x16x16xf32>
      tpu.vector_store %arg6[%c0_22, %c3_23, %c0_24, %c0_25], %37 {strides = array<i32>} : memref<1x4x16x16xf32, #tpu.memory_space<vmem>>, vector<1x1x16x16xf32>,
    } else {
    }
    return
  }
  func.func @transform_0(%arg0: i32, %arg1: i32, %arg2: i32, %arg3: i32) -> (i32, i32, i32) {
    %c0_i32 = arith.constant 0 : i32
    %c0_i32_0 = arith.constant 0 : i32
    return %arg0, %c0_i32, %arg2 : i32, i32, i32
  }
  func.func @transform_1(%arg0: i32, %arg1: i32, %arg2: i32, %arg3: i32) -> (i32, i32, i32) {
    %c0_i32 = arith.constant 0 : i32
    %c0_i32_0 = arith.constant 0 : i32
    return %arg0, %c0_i32, %arg3 : i32, i32, i32
  }
  func.func @transform_2(%arg0: i32, %arg1: i32, %arg2: i32, %arg3: i32) -> (i32, i32, i32, i32) {
    %c0_i32 = arith.constant 0 : i32
    return %arg0, %arg1, %arg2, %arg3 : i32, i32, i32, i32
  }
}

</mosaic_0001>

<llo_original>
// kernel: tpu_custom_call.1
$region0: #{tpu_custom_call.1}
  #allocation0 [shape = 'u32[]', space=smem, size = 0x4, offset = 0x4, fixed_abs, tag = 'smem constant byte address 0x4 - core index']
  #allocation1 [shape = 'u32[144,128]{1,0:T(1,128)}', space=vmem, size = 0x12000, scoped, tag = 'internal scratch']
  %s0 = inlined_call_operand.hbm [shape: f32[2,4,16], index: 0, kind: input, shape index: {}]
  %s1 = inlined_call_operand.hbm [shape: f32[2,4,16], index: 1, kind: input, shape index: {}]
  %s2 = inlined_call_operand.hbm [shape: f32[2,8,16,16], index: 2, kind: output, shape index: {}]
  %s3 = sld [smem:[#allocation0]]
  $region57: #{tpu_custom_call.1} parent=0
    _
  %s5 = ssub.s32 1, %s3
  %s6 = scalar_select 0, %s5, %s3
  $region1: #{tpu_custom_call.1} parent=0
    #allocation2 [shape = 'u8[4096]{0}', space=vmem, size = 0x1000, scoped, tag = 'input window, operand 0']
    #allocation3 [shape = 's32[2]{0}', space=sflag, size = 0x8, scoped, tag = 'scoped memory for tpu_custom_call.1']
    #allocation4 [shape = 's32[2]{0}', space=sflag, size = 0x8, scoped, tag = 'scoped memory for tpu_custom_call.1']
    #allocation5 [shape = 'u8[4096]{0}', space=vmem, size = 0x1000, scoped, tag = 'input window, operand 1']
    #allocation6 [shape = 's32[2]{0}', space=sflag, size = 0x8, scoped, tag = 'scoped memory for tpu_custom_call.1']
    #allocation7 [shape = 'u8[65536]{0}', space=vmem, size = 0x10000, scoped, tag = 'output window, operand 0']
    %7 = vsyncpa [#allocation3], 0
    %s8 = scalar_lea.sflag [#allocation3], 1
    %9 = vsyncpa %s8, 0
    %10 = vsyncpa [#allocation6], 0
    %s11 = scalar_lea.sflag [#allocation6], 1
    %12 = vsyncpa %s11, 0
    %13 = vsyncpa [#allocation4], 0
    %s14 = scalar_lea.sflag [#allocation4], 1
    %15 = vsyncpa %s14, 0
    loop: start=0, step=1, limit=6
    $region2: #{tpu_custom_call.1} parent=1 // loop_pre_header
      _
    $region3: #{tpu_custom_call.1} parent=1 // loop_header
      %s17 = sphi 0, %s21
      %p18 = scmp.ge.s32.totalorder %s17, 6
      %s24 = sphi 0, %s50
      %s25 = sphi 0, %s46
      %s26 = sphi 0, %s42
      %s27 = sphi 0, %s38
      %s28 = sphi 0, %s24
      %s29 = sphi 0, %s25
      %s30 = sphi 0, %s26
      %s31 = sphi 0, %s27
      %s32 = sphi 0, %s28
      %s33 = sphi 0, %s29
      %s34 = sphi 0, %s30
      %s35 = sphi 0, %s31
      %s55 = sphi 0, %s57
      %s58 = sphi 0, %s55
      %s59 = sphi 0, %s58
      %s75 = sphi 0, %s59
      %s83 = sphi 0, %s85
      %s86 = sphi 0, %s83
      %s87 = sphi 0, %s86
      %s103 = sphi 0, %s87
      %s115 = sphi 0, %s117
      %s118 = sphi 0, %s115
      %s119 = sphi 0, %s118
      %s135 = sphi 0, %s119
    $region4: #{tpu_custom_call.1} parent=1 // loop_header_branch
      %20 = sbr.rel (%p18) target = $region8
    $region5: #{tpu_custom_call.1} parent=1 // loop_body
      %s22 = ssub.s32 %s17, 1
      %s23 = ssub.s32 %s17, 2
      %s36 = sadd.s32 1, %s27
      %p37 = scmp.ge.s32.totalorder %s36, 1
      %s38 = scalar_select %p37, 0, %s36
      %s39 = sadd.s32 1, %s26
      %s40 = scalar_select %p37, %s39, %s26
      %p41 = scmp.ge.s32.totalorder %s40, 1
      %s42 = scalar_select %p41, 0, %s40
      %s43 = sadd.s32 1, %s25
      %s44 = scalar_select %p41, %s43, %s25
      %p45 = scmp.ge.s32.totalorder %s44, 2
      %s46 = scalar_select %p45, 0, %s44
      %s47 = sadd.s32 1, %s24
      %s48 = scalar_select %p45, %s47, %s24
      %p49 = scmp.ge.s32.totalorder %s48, 2
      %s50 = scalar_select %p49, 0, %s48
      %s51 = ssub.s32 %s24, %s50
      %s52 = ssub.s32 %s26, %s42
      %s53 = sor.u32 %s51, %s52
      %p54 = scmp.eq.s32.totalorder %s53, 0
      %s56 = sadd.s32 %s55, 1
      %s57 = scalar_select %p54, %s55, %s56
      %p60 = pneg %p54
      %p61 = scmp.eq.s32.totalorder %s17, 3
      %p62 = por %p60, %p61
      %p63 = scmp.ne.s32.totalorder %s55, %s58
      %p64 = scmp.eq.s32.totalorder %s17, 0
      %p65 = por %p63, %p64
      %p66 = scmp.ne.s32.totalorder %s55, %s58
      %p67 = scmp.eq.s32.totalorder %s22, 3
      %p68 = por %p66, %p67
      %p69 = scmp.ne.s32.totalorder %s58, %s59
      %p70 = scmp.eq.s32.totalorder %s22, 0
      %p71 = por %p69, %p70
      %p72 = scmp.ne.s32.totalorder %s58, %s59
      %p73 = scmp.eq.s32.totalorder %s23, 3
      %p74 = por %p72, %p73
      %p76 = scmp.ne.s32.totalorder %s59, %s75
      %p77 = scmp.eq.s32.totalorder %s23, 0
      %p78 = por %p76, %p77
      %s79 = ssub.s32 %s24, %s50
      %s80 = ssub.s32 %s27, %s38
      %s81 = sor.u32 %s79, %s80
      %p82 = scmp.eq.s32.totalorder %s81, 0
      %s84 = sadd.s32 %s83, 1
      %s85 = scalar_select %p82, %s83, %s84
      %p88 = pneg %p82
      %p89 = scmp.eq.s32.totalorder %s17, 3
      %p90 = por %p88, %p89
      %p91 = scmp.ne.s32.totalorder %s83, %s86
      %p92 = scmp.eq.s32.totalorder %s17, 0
      %p93 = por %p91, %p92
      %p94 = scmp.ne.s32.totalorder %s83, %s86
      %p95 = scmp.eq.s32.totalorder %s22, 3
      %p96 = por %p94, %p95
      %p97 = scmp.ne.s32.totalorder %s86, %s87
      %p98 = scmp.eq.s32.totalorder %s22, 0
      %p99 = por %p97, %p98
      %p100 = scmp.ne.s32.totalorder %s86, %s87
      %p101 = scmp.eq.s32.totalorder %s23, 3
      %p102 = por %p100, %p101
      %p104 = scmp.ne.s32.totalorder %s87, %s103
      %p105 = scmp.eq.s32.totalorder %s23, 0
      %p106 = por %p104, %p105
      %s107 = ssub.s32 %s24, %s50
      %s108 = ssub.s32 %s25, %s46
      %s109 = sor.u32 %s107, %s108
      %s110 = ssub.s32 %s26, %s42
      %s111 = sor.u32 %s109, %s110
      %s112 = ssub.s32 %s27, %s38
      %s113 = sor.u32 %s111, %s112
      %p114 = scmp.eq.s32.totalorder %s113, 0
      %s116 = sadd.s32 %s115, 1
      %s117 = scalar_select %p114, %s115, %s116
      %p120 = pneg %p114
      %p121 = scmp.eq.s32.totalorder %s17, 3
      %p122 = por %p120, %p121
      %p123 = scmp.ne.s32.totalorder %s115, %s118
      %p124 = scmp.eq.s32.totalorder %s17, 0
      %p125 = por %p123, %p124
      %p126 = scmp.ne.s32.totalorder %s115, %s118
      %p127 = scmp.eq.s32.totalorder %s22, 3
      %p128 = por %p126, %p127
      %p129 = scmp.ne.s32.totalorder %s118, %s119
      %p130 = scmp.eq.s32.totalorder %s22, 0
      %p131 = por %p129, %p130
      %p132 = scmp.ne.s32.totalorder %s118, %s119
      %p133 = scmp.eq.s32.totalorder %s23, 3
      %p134 = por %p132, %p133
      %p136 = scmp.ne.s32.totalorder %s119, %s135
      %p137 = scmp.eq.s32.totalorder %s23, 0
      %p138 = por %p136, %p137
      %p139 = scmp.le.s32.totalorder 1, %s17
      %p140 = scmp.lt.s32.totalorder %s17, 5
      %p141 = pnand %p139, %p140
      %p142 = pneg %p141
      // Predicated region
      $region9: #{tpu_custom_call.1} parent=5 // pred_check
        _
      $region10: #{tpu_custom_call.1} parent=5 // pred_check_branch
        %144 = sbr.rel (%p141) target = $region12
      $region11: #{tpu_custom_call.1} parent=5 // pred_region
        %s145 = ssub.s32 %s17, 1
      $region12: #{tpu_custom_call.1} parent=5 // pred_fallthru
        _
      %p146 = scmp.lt.s32.totalorder %s17, 4
      // Predicated region
      $region13: #{tpu_custom_call.1} parent=5 // pred_check
        %p147 = pneg %p146
      $region14: #{tpu_custom_call.1} parent=5 // pred_check_branch
        %149 = sbr.rel (%p147) target = $region16
      $region15: #{tpu_custom_call.1} parent=5 // pred_region
        // Predicated region
        $region17: #{tpu_custom_call.1} parent=15 // pred_check
          %p150 = pneg %p65
        $region18: #{tpu_custom_call.1} parent=15 // pred_check_branch
          %152 = sbr.rel (%p150) target = $region20
        $region19: #{tpu_custom_call.1} parent=15 // pred_region
          %s153 = sand.u32 %s55, 1
          %s154 = scalar_lea.sflag [#allocation3], %s153
          %s155 = sand.u32 %s55, 1
          %s156 = smul.addr %s155, 4
          %s157 = scalar_lea.vmem [#allocation2], %s156
          %s159 = ssub.s32 64, 64
          %160 = vsyncadd %s154, %s159
          %s161 = sadd.s32 %s26, %s24
          %s162 = smul.addr %s161, 64
          %s163 = scalar_lea.hbm %s0, %s162
          %s165 = sshll.u32 %s157, 4
          %s166 = int_to_ptr.vmem [resolvable:$true] %s165
          %168 = dma.hbm_to_vmem [thread:$0]  %s163, 64, %s166, %s154
        $region20: #{tpu_custom_call.1} parent=15 // pred_fallthru
          _
        // Predicated region
        $region21: #{tpu_custom_call.1} parent=15 // pred_check
          %p169 = pneg %p93
        $region22: #{tpu_custom_call.1} parent=15 // pred_check_branch
          %171 = sbr.rel (%p169) target = $region24
        $region23: #{tpu_custom_call.1} parent=15 // pred_region
          %s172 = sand.u32 %s83, 1
          %s173 = scalar_lea.sflag [#allocation6], %s172
          %s174 = sand.u32 %s83, 1
          %s175 = smul.addr %s174, 4
          %s176 = scalar_lea.vmem [#allocation5], %s175
          %s178 = ssub.s32 64, 64
          %179 = vsyncadd %s173, %s178
          %s180 = sadd.s32 %s27, %s24
          %s181 = smul.addr %s180, 64
          %s182 = scalar_lea.hbm %s1, %s181
          %s184 = sshll.u32 %s176, 4
          %s185 = int_to_ptr.vmem [resolvable:$true] %s184
          %187 = dma.hbm_to_vmem [thread:$0]  %s182, 64, %s185, %s173
        $region24: #{tpu_custom_call.1} parent=15 // pred_fallthru
          _
      $region16: #{tpu_custom_call.1} parent=5 // pred_fallthru
        _
      %p188 = scmp.le.s32.totalorder 1, %s17
      %p189 = scmp.lt.s32.totalorder %s17, 5
      %p190 = pnand %p188, %p189
      %p191 = pneg %p190
      // Predicated region
      $region25: #{tpu_custom_call.1} parent=5 // pred_check
        _
      $region26: #{tpu_custom_call.1} parent=5 // pred_check_branch
        %193 = sbr.rel (%p190) target = $region28
      $region27: #{tpu_custom_call.1} parent=5 // pred_region
        %s194 = ssub.s32 %s17, 1
        %s195 = sand.u32 %s58, 1
        %s196 = scalar_lea.sflag [#allocation3], %s195
        %s197 = sand.u32 %s58, 1
        %s198 = smul.addr %s197, 4
        %s199 = scalar_lea.vmem [#allocation2], %s198
        // Predicated region
        $region29: #{tpu_custom_call.1} parent=27 // pred_check
          %p200 = pneg %p71
        $region30: #{tpu_custom_call.1} parent=27 // pred_check_branch
          %202 = sbr.rel (%p200) target = $region32
        $region31: #{tpu_custom_call.1} parent=27 // pred_region
          %203 = dma.done %s196, 64
        $region32: #{tpu_custom_call.1} parent=27 // pred_fallthru
          _
        %s204 = sand.u32 %s86, 1
        %s205 = scalar_lea.sflag [#allocation6], %s204
        %s206 = sand.u32 %s86, 1
        %s207 = smul.addr %s206, 4
        %s208 = scalar_lea.vmem [#allocation5], %s207
        // Predicated region
        $region33: #{tpu_custom_call.1} parent=27 // pred_check
          %p209 = pneg %p99
        $region34: #{tpu_custom_call.1} parent=27 // pred_check_branch
          %211 = sbr.rel (%p209) target = $region36
        $region35: #{tpu_custom_call.1} parent=27 // pred_region
          %212 = dma.done %s205, 64
        $region36: #{tpu_custom_call.1} parent=27 // pred_fallthru
          _
        %s213 = sand.u32 %s58, 1
        %s214 = scalar_lea.sflag [#allocation3], %s213
        %s215 = sand.u32 %s58, 1
        %s216 = smul.addr %s215, 4
        %s217 = scalar_lea.vmem [#allocation2], %s216
        %p218 = pneg %p71
        %p219 = pneg %p68
        %s220 = sand.u32 %s86, 1
        %s221 = scalar_lea.sflag [#allocation6], %s220
        %s222 = sand.u32 %s86, 1
        %s223 = smul.addr %s222, 4
        %s224 = scalar_lea.vmem [#allocation5], %s223
        %p225 = pneg %p99
        %p226 = pneg %p96
        %p227 = pneg %p131
        %p228 = pneg %p128
        %s229 = sand.u32 %s118, 1
        %s230 = scalar_lea.sflag [#allocation4], %s229
        %s231 = sand.u32 %s118, 1
        %s232 = smul.addr %s231, 64
        %s233 = scalar_lea.vmem [#allocation7], %s232
        %s234 = smul.u32 4, %s29
        %s235 = smul.u32 2, %s30
        %p236 = scmp.eq.s32.totalorder %s29, 0
        // Predicated region
        $region37: #{tpu_custom_call.1} parent=27 // pred_check
          %p237 = pneg %p236
        $region38: #{tpu_custom_call.1} parent=27 // pred_check_branch
          %239 = sbr.rel (%p237) target = $region40
        $region39: #{tpu_custom_call.1} parent=27 // pred_region
          %v240 = vld [vmem:[%s199] sm:$0x1]
          %v241 = vlaneseq
          %v242 = vshrl.u32 %v241, 7
          %v243 = vsub.s32 0, %v242
          %v244 = vrot.slane %v240, %v243
          %246 = vbcast.lane.b32.xlu0 %v244, 256
          %v247 = vpop.permute.xlu0 %246
          %s249 = sor.u32 256, 8
          %250 = vbcast.lane.b32.xlu0 %v244, %s249
          %v251 = vpop.permute.xlu0 %250
          %vm252 = vcmask 130048
          %253 = vst.msk [vmem:[%s233] sm:$0xff] %vm252, %v247
          %254 = vst.msk [vmem:[%s233 + $0x8] sm:$0xff] %vm252, %v251
          %v255 = vld [vmem:[%s199 + $0x1] sm:$0x1]
          %v256 = vlaneseq
          %v257 = vshrl.u32 %v256, 7
          %v258 = vsub.s32 0, %v257
          %v259 = vrot.slane %v255, %v258
          %261 = vbcast.lane.b32.xlu0 %v259, 256
          %v262 = vpop.permute.xlu0 %261
          %s264 = sor.u32 256, 8
          %265 = vbcast.lane.b32.xlu0 %v259, %s264
          %v266 = vpop.permute.xlu0 %265
          %s267 = scalar_lea.vmem %s233, 16 [#allocation7]
          %268 = vst.msk [vmem:[%s267] sm:$0xff] %vm252, %v262
          %269 = vst.msk [vmem:[%s267 + $0x8] sm:$0xff] %vm252, %v266
          %v270 = vld [vmem:[%s199 + $0x2] sm:$0x1]
          %v271 = vlaneseq
          %v272 = vshrl.u32 %v271, 7
          %v273 = vsub.s32 0, %v272
          %v274 = vrot.slane %v270, %v273
          %276 = vbcast.lane.b32.xlu0 %v274, 256
          %v277 = vpop.permute.xlu0 %276
          %s279 = sor.u32 256, 8
          %280 = vbcast.lane.b32.xlu0 %v274, %s279
          %v281 = vpop.permute.xlu0 %280
          %s282 = scalar_lea.vmem %s233, 32 [#allocation7]
          %283 = vst.msk [vmem:[%s282] sm:$0xff] %vm252, %v277
          %284 = vst.msk [vmem:[%s282 + $0x8] sm:$0xff] %vm252, %v281
          %v285 = vld [vmem:[%s199 + $0x3] sm:$0x1]
          %v286 = vlaneseq
          %v287 = vshrl.u32 %v286, 7
          %v288 = vsub.s32 0, %v287
          %v289 = vrot.slane %v285, %v288
          %291 = vbcast.lane.b32.xlu0 %v289, 256
          %v292 = vpop.permute.xlu0 %291
          %s294 = sor.u32 256, 8
          %295 = vbcast.lane.b32.xlu0 %v289, %s294
          %v296 = vpop.permute.xlu0 %295
          %s297 = scalar_lea.vmem %s233, 48 [#allocation7]
          %298 = vst.msk [vmem:[%s297] sm:$0xff] %vm252, %v292
          %299 = vst.msk [vmem:[%s297 + $0x8] sm:$0xff] %vm252, %v296
        $region40: #{tpu_custom_call.1} parent=27 // pred_fallthru
          _
        %p300 = scmp.eq.s32.totalorder %s29, 1
        // Predicated region
        $region41: #{tpu_custom_call.1} parent=27 // pred_check
          %p301 = pneg %p300
        $region42: #{tpu_custom_call.1} parent=27 // pred_check_branch
          %303 = sbr.rel (%p301) target = $region44
        $region43: #{tpu_custom_call.1} parent=27 // pred_region
          %v304 = vld [vmem:[%s208] sm:$0x1]
          %v305 = vlaneseq
          %v306 = vshrl.u32 %v305, 7
          %v307 = vsub.s32 0, %v306
          %v308 = vrot.slane %v304, %v307
          %vm309 = vcmask 130048
          %310 = vst.msk [vmem:[%s233] sm:$0xff] %vm309, %v308
          %311 = vst.msk [vmem:[%s233 + $0x8] sm:$0xff] %vm309, %v308
          %v312 = vld [vmem:[%s208 + $0x1] sm:$0x1]
          %v313 = vlaneseq
          %v314 = vshrl.u32 %v313, 7
          %v315 = vsub.s32 0, %v314
          %v316 = vrot.slane %v312, %v315
          %s317 = scalar_lea.vmem %s233, 16 [#allocation7]
          %318 = vst.msk [vmem:[%s317] sm:$0xff] %vm309, %v316
          %319 = vst.msk [vmem:[%s317 + $0x8] sm:$0xff] %vm309, %v316
          %v320 = vld [vmem:[%s208 + $0x2] sm:$0x1]
          %v321 = vlaneseq
          %v322 = vshrl.u32 %v321, 7
          %v323 = vsub.s32 0, %v322
          %v324 = vrot.slane %v320, %v323
          %s325 = scalar_lea.vmem %s233, 32 [#allocation7]
          %326 = vst.msk [vmem:[%s325] sm:$0xff] %vm309, %v324
          %327 = vst.msk [vmem:[%s325 + $0x8] sm:$0xff] %vm309, %v324
          %v328 = vld [vmem:[%s208 + $0x3] sm:$0x1]
          %v329 = vlaneseq
          %v330 = vshrl.u32 %v329, 7
          %v331 = vsub.s32 0, %v330
          %v332 = vrot.slane %v328, %v331
          %s333 = scalar_lea.vmem %s233, 48 [#allocation7]
          %334 = vst.msk [vmem:[%s333] sm:$0xff] %vm309, %v332
          %335 = vst.msk [vmem:[%s333 + $0x8] sm:$0xff] %vm309, %v332
        $region44: #{tpu_custom_call.1} parent=27 // pred_fallthru
          _
        %s336 = sand.u32 %s118, 1
        %s337 = scalar_lea.sflag [#allocation4], %s336
        %s338 = sand.u32 %s118, 1
        %s339 = smul.addr %s338, 64
        %s340 = scalar_lea.vmem [#allocation7], %s339
        // Predicated region
        $region45: #{tpu_custom_call.1} parent=27 // pred_check
          %p341 = pneg %p128
        $region46: #{tpu_custom_call.1} parent=27 // pred_check_branch
          %343 = sbr.rel (%p341) target = $region48
        $region47: #{tpu_custom_call.1} parent=27 // pred_region
          %s344 = smul.u32 4, %s29
          %s345 = smul.u32 2, %s30
          %s347 = ssub.s32 1024, 1024
          %348 = vsyncadd %s337, %s347
          %s349 = sadd.s32 %s31, %s345
          %s350 = smul.addr %s344, 2
          %s351 = sadd.s32 %s349, %s350
          %s352 = smul.addr %s28, 16
          %s353 = sadd.s32 %s351, %s352
          %s354 = smul.addr %s353, 128
          %s355 = scalar_lea.hbm %s2, %s354
          %s356 = sshll.u32 %s340, 4
          %s357 = int_to_ptr.vmem [resolvable:$true] %s356
          %362 = dma.vmem_to_hbm [thread:$0]  %s357, 1024, %s355, %s337, 128, 128, 8
        $region48: #{tpu_custom_call.1} parent=27 // pred_fallthru
          _
      $region28: #{tpu_custom_call.1} parent=5 // pred_fallthru
        _
      %p363 = scmp.le.s32.totalorder 2, %s17
      // Predicated region
      $region49: #{tpu_custom_call.1} parent=5 // pred_check
        %p364 = pneg %p363
      $region50: #{tpu_custom_call.1} parent=5 // pred_check_branch
        %366 = sbr.rel (%p364) target = $region52
      $region51: #{tpu_custom_call.1} parent=5 // pred_region
        %s367 = ssub.s32 %s17, 2
        // Predicated region
        $region53: #{tpu_custom_call.1} parent=51 // pred_check
          %p368 = pneg %p134
        $region54: #{tpu_custom_call.1} parent=51 // pred_check_branch
          %370 = sbr.rel (%p368) target = $region56
        $region55: #{tpu_custom_call.1} parent=51 // pred_region
          %s371 = sand.u32 %s119, 1
          %s372 = scalar_lea.sflag [#allocation4], %s371
          %s373 = sand.u32 %s119, 1
          %s374 = smul.addr %s373, 64
          %s375 = scalar_lea.vmem [#allocation7], %s374
          %376 = dma.done %s372, 1024
        $region56: #{tpu_custom_call.1} parent=51 // pred_fallthru
          _
      $region52: #{tpu_custom_call.1} parent=5 // pred_fallthru
        _
    $region6: #{tpu_custom_call.1} parent=1 // loop_footer
      %s21 = sadd.s32 1, %s17
    $region7: #{tpu_custom_call.1} parent=1 // loop_footer_branch
      %16 = sbr.rel target = $region3
    $region8: #{tpu_custom_call.1} parent=1 // loop_exit
      _
    %377 = vsyncpa [#allocation3], 1
    %s378 = scalar_lea.sflag [#allocation3], 1
    %379 = vsyncpa %s378, 1
    %380 = vsyncpa [#allocation6], 1
    %s381 = scalar_lea.sflag [#allocation6], 1
    %382 = vsyncpa %s381, 1
    %383 = vsyncpa [#allocation4], 1
    %s384 = scalar_lea.sflag [#allocation4], 1
    %385 = vsyncpa %s384, 1

</llo_original>
